<compile_context>
chip_gen: v5e
topology: v5e:2x2
jax: 0.10.0
libtpu: 0.0.40
codegen_flags: <defaults>
</compile_context>

<pallas_src>
import math
import functools

import jax
import jax.numpy as jnp
from jax.experimental import pallas as pl
from jax.experimental.pallas import tpu as pltpu


def _attention_kernel(x_ref, wqkv_ref, bqkv_ref, wo_ref, bo_ref,
                      o_ref, att_ref, *, num_heads, dk, bt, seq):
    hidden = num_heads * dk
    inv_sqrt_dk = 1.0 / math.sqrt(dk)

    # (Bt, S, H) -> (Bt*S, H): fold the batch tile into the matmul M dim.
    x2 = x_ref[...].reshape(bt * seq, hidden)                      # bf16

    # Single fused Q/K/V projection: bf16 MXU inputs, f32 accumulation,
    # f32 bias. Result is (Bt*S, 3H).
    qkv = jnp.dot(x2, wqkv_ref[...],
                  preferred_element_type=jnp.float32) + bqkv_ref[...]

    # Apply the attention scale once to Q (cheaper than scaling every
    # per-head (Bt, S, S) score tile).
    q = qkv[:, 0 * hidden:1 * hidden] * inv_sqrt_dk
    k = qkv[:, 1 * hidden:2 * hidden]
    v = qkv[:, 2 * hidden:3 * hidden]

    head_outs = []
    for h in range(num_heads):                 # static unroll, num_heads small
        lo, hi = h * dk, (h + 1) * dk
        qh = q[:, lo:hi].reshape(bt, seq, dk)                      # (Bt, S, dk)
        kh = k[:, lo:hi].reshape(bt, seq, dk)
        vh = v[:, lo:hi].reshape(bt, seq, dk)

        # scores[b, i, j] = <q_i, k_j> / sqrt(dk); batched over Bt, no .T —
        # the contraction is on the last dim of both operands.
        scores = jnp.einsum('bqd,bkd->bqk', qh, kh,
                            preferred_element_type=jnp.float32)    # (Bt, S, S)

        # numerically stable softmax over keys (f32 math, EUP exp + recip)
        m = jnp.max(scores, axis=-1, keepdims=True)
        e = jnp.exp(scores - m)
        denom = jnp.sum(e, axis=-1, keepdims=True)
        attw = e * pl.reciprocal(denom, approx=True)               # (Bt, S, S)

        # write this head's attention weights directly (no stack / relayout)
        att_ref[h] = attw.astype(att_ref.dtype)

        head_outs.append(
            jnp.einsum('bqk,bkd->bqd',
                       attw.astype(jnp.bfloat16), vh.astype(jnp.bfloat16),
                       preferred_element_type=jnp.float32))        # (Bt, S, dk)

    # concat heads on the feature (lane) dim, then the output projection.
    concat = jnp.concatenate(head_outs, axis=-1)                   # (Bt, S, H)
    concat2 = concat.reshape(bt * seq, hidden).astype(jnp.bfloat16)
    y = jnp.dot(concat2, wo_ref[...],
                preferred_element_type=jnp.float32) + bo_ref[...]
    o_ref[...] = y.reshape(bt, seq, hidden).astype(o_ref.dtype)


def attention_pallas(x_sbh, params, *, num_heads, batch_tile=None):
    """x_sbh: (S, B, H) float32, matching the PyTorch layout.
    Returns (y (S, B, H) f32, att_weights (num_heads, B, S, S) f32)."""
    S, B, H = x_sbh.shape
    dk = H // num_heads
    wq, bq, wk, bk, wv, bv, wo, bo = params

    # Largest batch tile <= 16 dividing B (fills the MXU M dim at small S and
    # amortizes per-grid-step overhead).
    if batch_tile is None:
        batch_tile = 1
        for cand in range(min(B, 16), 0, -1):
            if B % cand == 0:
                batch_tile = cand
                break
    bt = batch_tile
    assert B % bt == 0, "batch_tile must divide B"

    # (S, B, H) -> (B, S, H); bf16 halves x + weight DMA bytes and doubles
    # MXU throughput; accumulation stays f32 inside the kernel.
    x = jnp.transpose(x_sbh, (1, 0, 2)).astype(jnp.bfloat16)

    # Fuse Q/K/V weights & biases along the output dim -> single matmul.
    wqkv = jnp.concatenate([wq, wk, wv], axis=1).astype(jnp.bfloat16)  # (H, 3H)
    bqkv = jnp.concatenate([bq, bk, bv], axis=1)                       # (1, 3H) f32
    wo_b = wo.astype(jnp.bfloat16)

    kernel = functools.partial(_attention_kernel, num_heads=num_heads,
                               dk=dk, bt=bt, seq=S)

    y, att = pl.pallas_call(
        kernel,
        out_shape=(
            jax.ShapeDtypeStruct((B, S, H), jnp.float32),
            jax.ShapeDtypeStruct((num_heads, B, S, S), jnp.float32),
        ),
        grid_spec=pltpu.PrefetchScalarGridSpec(
            num_scalar_prefetch=0,
            grid=(B // bt,),
            in_specs=[
                pl.BlockSpec((bt, S, H), lambda b: (b, 0, 0)),      # x
                pl.BlockSpec((H, 3 * H), lambda b: (0, 0)),         # Wqkv
                pl.BlockSpec((1, 3 * H), lambda b: (0, 0)),         # bqkv
                pl.BlockSpec((H, H), lambda b: (0, 0)),             # Wo
                pl.BlockSpec((1, H), lambda b: (0, 0)),             # bo
            ],
            out_specs=[
                pl.BlockSpec((bt, S, H), lambda b: (b, 0, 0)),
                pl.BlockSpec((num_heads, bt, S, S), lambda b: (0, b, 0, 0)),
            ],
        ),
        compiler_params=pltpu.CompilerParams(
            dimension_semantics=("parallel",)),
    )(x, wqkv, bqkv, wo_b, bo)

    # back to (S, B, H)
    return jnp.transpose(y, (1, 0, 2)), att


def init_params(key, hidden_dim, num_heads):
    """Deterministic init mimicking the shapes of the PyTorch module.

    PyTorch Linear computes y = x @ W.T + b with W of shape (out, in); we
    store weights already transposed to (in, out) and stack the per-head
    projections along the output dim -> (H, H)."""
    dk = hidden_dim // num_heads
    keys = jax.random.split(key, 8)
    scale = 1.0 / math.sqrt(hidden_dim)

    def u(k, shape):
        return jax.random.uniform(k, shape, jnp.float32, -scale, scale)

    wq = u(keys[0], (hidden_dim, num_heads * dk))
    bq = u(keys[1], (1, num_heads * dk))
    wk = u(keys[2], (hidden_dim, num_heads * dk))
    bk = u(keys[3], (1, num_heads * dk))
    wv = u(keys[4], (hidden_dim, num_heads * dk))
    bv = u(keys[5], (1, num_heads * dk))
    wo = u(keys[6], (hidden_dim, hidden_dim))
    bo = u(keys[7], (1, hidden_dim))
    return (wq, bq, wk, bk, wv, bv, wo, bo)


def attention_reference(x_sbh, params, *, num_heads):
    """Pure-JAX f32 reference replicating the PyTorch forward exactly."""
    S, B, H = x_sbh.shape
    dk = H // num_heads
    wq, bq, wk, bk, wv, bv, wo, bo = params

    q = jnp.einsum('sbh,hd->sbd', x_sbh, wq) + bq[0]
    k = jnp.einsum('sbh,hd->sbd', x_sbh, wk) + bk[0]
    v = jnp.einsum('sbh,hd->sbd', x_sbh, wv) + bv[0]

    outs, atts = [], []
    for h in range(num_heads):
        qh = q[..., h * dk:(h + 1) * dk]
        kh = k[..., h * dk:(h + 1) * dk]
        vh = v[..., h * dk:(h + 1) * dk]
        qkt = jnp.einsum('ibk,jbk->bij', qh, kh) / math.sqrt(dk)
        attw = jax.nn.softmax(qkt, axis=2)
        outs.append(jnp.einsum('bik,kbj->ibj', attw, vh))
        atts.append(attw)
    concat = jnp.concatenate(outs, axis=2)
    y = jnp.einsum('sbh,hd->sbd', concat, wo) + bo[0]
    return y, jnp.stack(atts)


if __name__ == "__main__":
    S, B, H, NUM_HEADS = 8, 2, 32, 4

    key = jax.random.PRNGKey(0)
    kx, kp = jax.random.split(key)
    x = jax.random.normal(kx, (S, B, H), jnp.float32)     # (seq, batch, hidden)
    params = init_params(kp, H, NUM_HEADS)

    y, att = attention_pallas(x, params, num_heads=NUM_HEADS)
    jax.block_until_ready((y, att))

    y_ref, att_ref = attention_reference(x, params, num_heads=NUM_HEADS)
    # Tolerances relaxed for bf16 MXU inputs + approx reciprocal.
    assert jnp.allclose(y, y_ref, atol=2e-2, rtol=2e-2)
    assert jnp.allclose(att, att_ref, atol=2e-2, rtol=2e-2)

    print("KERNEL_OK")
</pallas_src>

<mosaic_0001>
module attributes {stable_mosaic.version = 11 : i64} {
  func.func @_attention_kernel(%arg0: i32, %arg1: memref<2x8x32xbf16, #tpu.memory_space<vmem>>, %arg2: memref<32x96xbf16, #tpu.memory_space<vmem>>, %arg3: memref<1x96xf32, #tpu.memory_space<vmem>>, %arg4: memref<32x32xbf16, #tpu.memory_space<vmem>>, %arg5: memref<1x32xf32, #tpu.memory_space<vmem>>, %arg6: memref<2x8x32xf32, #tpu.memory_space<vmem>>, %arg7: memref<4x2x8x8xf32, #tpu.memory_space<vmem>>) attributes {dimension_semantics = [#tpu.dimension_semantics<parallel>], iteration_bounds = array<i64: 1>, scalar_prefetch = 0 : i64, scratch_operands = 0 : i64, tpu.core_type = #tpu.core_type<tc>, window_params = [{transform_indices = @transform_0, window_bounds = array<i64: 2, 8, 32>}, {pipeline_mode = #tpu.pipeline_mode<synchronous>, transform_indices = @transform_1, window_bounds = array<i64: 32, 96>}, {pipeline_mode = #tpu.pipeline_mode<synchronous>, transform_indices = @transform_2, window_bounds = array<i64: 1, 96>}, {pipeline_mode = #tpu.pipeline_mode<synchronous>, transform_indices = @transform_3, window_bounds = array<i64: 32, 32>}, {pipeline_mode = #tpu.pipeline_mode<synchronous>, transform_indices = @transform_4, window_bounds = array<i64: 1, 32>}, {transform_indices = @transform_5, window_bounds = array<i64: 2, 8, 32>}, {transform_indices = @transform_6, window_bounds = array<i64: 4, 2, 8, 8>}]} {
    %c0 = arith.constant 0 : index
    %c0_0 = arith.constant 0 : index
    %c0_1 = arith.constant 0 : index
    %0 = vector.load %arg1[%c0, %c0_0, %c0_1] : memref<2x8x32xbf16, #tpu.memory_space<vmem>>, vector<2x8x32xbf16>
    %1 = vector.shape_cast %0 : vector<2x8x32xbf16> to vector<16x32xbf16>
    %c0_2 = arith.constant 0 : index
    %c0_3 = arith.constant 0 : index
    %2 = vector.load %arg2[%c0_2, %c0_3] : memref<32x96xbf16, #tpu.memory_space<vmem>>, vector<32x96xbf16>
    %cst = arith.constant dense<0.000000e+00> : vector<16x96xf32>
    %3 = tpu.matmul %1, %2, %cst {dimension_numbers = #tpu.dot_dimension_numbers<[1], [0], [0], [1], [0, 0, 1, 1], [], []>} : vector<16x32xbf16>, vector<32x96xbf16>, vector<16x96xf32> -> vector<16x96xf32>
    %c0_4 = arith.constant 0 : index
    %c0_5 = arith.constant 0 : index
    %4 = vector.load %arg3[%c0_4, %c0_5] : memref<1x96xf32, #tpu.memory_space<vmem>>, vector<1x96xf32>
    %5 = vector.broadcast %4 : vector<1x96xf32> to vector<16x96xf32>
    %6 = arith.addf %3, %5 : vector<16x96xf32>
    %7 = vector.extract_strided_slice %6 {offsets = [0, 0], sizes = [16, 32], strides = [1, 1]} : vector<16x96xf32> to vector<16x32xf32>
    %cst_6 = arith.constant 0.353553385 : f32
    %8 = vector.broadcast %cst_6 : f32 to vector<16x32xf32>
    %9 = arith.mulf %7, %8 : vector<16x32xf32>
    %10 = vector.extract_strided_slice %6 {offsets = [0, 32], sizes = [16, 32], strides = [1, 1]} : vector<16x96xf32> to vector<16x32xf32>
    %11 = vector.extract_strided_slice %6 {offsets = [0, 64], sizes = [16, 32], strides = [1, 1]} : vector<16x96xf32> to vector<16x32xf32>
    %12 = vector.extract_strided_slice %9 {offsets = [0, 0], sizes = [16, 8], strides = [1, 1]} : vector<16x32xf32> to vector<16x8xf32>
    %13 = vector.shape_cast %12 : vector<16x8xf32> to vector<2x8x8xf32>
    %14 = vector.extract_strided_slice %10 {offsets = [0, 0], sizes = [16, 8], strides = [1, 1]} : vector<16x32xf32> to vector<16x8xf32>
    %15 = vector.shape_cast %14 : vector<16x8xf32> to vector<2x8x8xf32>
    %16 = vector.extract_strided_slice %11 {offsets = [0, 0], sizes = [16, 8], strides = [1, 1]} : vector<16x32xf32> to vector<16x8xf32>
    %17 = vector.shape_cast %16 : vector<16x8xf32> to vector<2x8x8xf32>
    "tpu.trace_start"() <{level = 10 : i32, message = "bqd,bkd->bqk"}> : () -> ()
    %cst_7 = arith.constant dense<0.000000e+00> : vector<2x8x8xf32>
    %18 = tpu.matmul %13, %15, %cst_7 {dimension_numbers = #tpu.dot_dimension_numbers<[2], [2], [1], [1], [0, 0, 0, 1, 1, 1], [0], [0]>} : vector<2x8x8xf32>, vector<2x8x8xf32>, vector<2x8x8xf32> -> vector<2x8x8xf32>
    "tpu.trace_stop"() : () -> ()
    %cst_8 = arith.constant dense<0xFF800000> : vector<2x8xf32>
    %19 = vector.multi_reduction <maximumf>, %18, %cst_8 [2] : vector<2x8x8xf32> to vector<2x8xf32>
    %20 = vector.shape_cast %19 : vector<2x8xf32> to vector<2x8x1xf32>
    %21 = vector.broadcast %20 : vector<2x8x1xf32> to vector<2x8x8xf32>
    %22 = arith.subf %18, %21 : vector<2x8x8xf32>
    %23 = math.exp %22 : vector<2x8x8xf32>
    %cst_9 = arith.constant dense<0.000000e+00> : vector<2x8xf32>
    %24 = vector.multi_reduction <add>, %23, %cst_9 [2] : vector<2x8x8xf32> to vector<2x8xf32>
    %25 = vector.shape_cast %24 : vector<2x8xf32> to vector<2x8x1xf32>
    %26 = tpu.reciprocal %25 {approx = true} : vector<2x8x1xf32> -> vector<2x8x1xf32>
    %27 = vector.broadcast %26 : vector<2x8x1xf32> to vector<2x8x8xf32>
    %28 = arith.mulf %23, %27 : vector<2x8x8xf32>
    %c0_10 = arith.constant 0 : index
    %c0_11 = arith.constant 0 : index
    %c0_12 = arith.constant 0 : index
    %c0_13 = arith.constant 0 : index
    %29 = vector.load %arg7[%c0_10, %c0_11, %c0_12, %c0_13] : memref<4x2x8x8xf32, #tpu.memory_space<vmem>>, vector<1x2x8x8xf32>
    %30 = vector.shape_cast %29 : vector<1x2x8x8xf32> to vector<2x8x8xf32>
    %31 = vector.shape_cast %28 : vector<2x8x8xf32> to vector<1x2x8x8xf32>
    tpu.vector_store %arg7[%c0_10, %c0_11, %c0_12, %c0_13], %31 {strides = array<i32>} : memref<4x2x8x8xf32, #tpu.memory_space<vmem>>, vector<1x2x8x8xf32>,
    %32 = arith.truncf %28 : vector<2x8x8xf32> to vector<2x8x8xbf16>
    %33 = arith.truncf %17 : vector<2x8x8xf32> to vector<2x8x8xbf16>
    "tpu.trace_start"() <{level = 10 : i32, message = "bqk,bkd->bqd"}> : () -> ()
    %cst_14 = arith.constant dense<0.000000e+00> : vector<2x8x8xf32>
    %34 = tpu.matmul %32, %33, %cst_14 {dimension_numbers = #tpu.dot_dimension_numbers<[2], [1], [1], [2], [0, 0, 0, 1, 1, 2], [0], [0]>} : vector<2x8x8xbf16>, vector<2x8x8xbf16>, vector<2x8x8xf32> -> vector<2x8x8xf32>
    "tpu.trace_stop"() : () -> ()
    %35 = vector.extract_strided_slice %9 {offsets = [0, 8], sizes = [16, 8], strides = [1, 1]} : vector<16x32xf32> to vector<16x8xf32>
    %36 = vector.shape_cast %35 : vector<16x8xf32> to vector<2x8x8xf32>
    %37 = vector.extract_strided_slice %10 {offsets = [0, 8], sizes = [16, 8], strides = [1, 1]} : vector<16x32xf32> to vector<16x8xf32>
    %38 = vector.shape_cast %37 : vector<16x8xf32> to vector<2x8x8xf32>
    %39 = vector.extract_strided_slice %11 {offsets = [0, 8], sizes = [16, 8], strides = [1, 1]} : vector<16x32xf32> to vector<16x8xf32>
    %40 = vector.shape_cast %39 : vector<16x8xf32> to vector<2x8x8xf32>
    "tpu.trace_start"() <{level = 10 : i32, message = "bqd,bkd->bqk"}> : () -> ()
    %cst_15 = arith.constant dense<0.000000e+00> : vector<2x8x8xf32>
    %41 = tpu.matmul %36, %38, %cst_15 {dimension_numbers = #tpu.dot_dimension_numbers<[2], [2], [1], [1], [0, 0, 0, 1, 1, 1], [0], [0]>} : vector<2x8x8xf32>, vector<2x8x8xf32>, vector<2x8x8xf32> -> vector<2x8x8xf32>
    "tpu.trace_stop"() : () -> ()
    %cst_16 = arith.constant dense<0xFF800000> : vector<2x8xf32>
    %42 = vector.multi_reduction <maximumf>, %41, %cst_16 [2] : vector<2x8x8xf32> to vector<2x8xf32>
    %43 = vector.shape_cast %42 : vector<2x8xf32> to vector<2x8x1xf32>
    %44 = vector.broadcast %43 : vector<2x8x1xf32> to vector<2x8x8xf32>
    %45 = arith.subf %41, %44 : vector<2x8x8xf32>
    %46 = math.exp %45 : vector<2x8x8xf32>
    %cst_17 = arith.constant dense<0.000000e+00> : vector<2x8xf32>
    %47 = vector.multi_reduction <add>, %46, %cst_17 [2] : vector<2x8x8xf32> to vector<2x8xf32>
    %48 = vector.shape_cast %47 : vector<2x8xf32> to vector<2x8x1xf32>
    %49 = tpu.reciprocal %48 {approx = true} : vector<2x8x1xf32> -> vector<2x8x1xf32>
    %50 = vector.broadcast %49 : vector<2x8x1xf32> to vector<2x8x8xf32>
    %51 = arith.mulf %46, %50 : vector<2x8x8xf32>
    %c1 = arith.constant 1 : index
    %c0_18 = arith.constant 0 : index
    %c0_19 = arith.constant 0 : index
    %c0_20 = arith.constant 0 : index
    %52 = vector.load %arg7[%c1, %c0_18, %c0_19, %c0_20] : memref<4x2x8x8xf32, #tpu.memory_space<vmem>>, vector<1x2x8x8xf32>
    %53 = vector.shape_cast %52 : vector<1x2x8x8xf32> to vector<2x8x8xf32>
    %54 = vector.shape_cast %51 : vector<2x8x8xf32> to vector<1x2x8x8xf32>
    tpu.vector_store %arg7[%c1, %c0_18, %c0_19, %c0_20], %54 {strides = array<i32>} : memref<4x2x8x8xf32, #tpu.memory_space<vmem>>, vector<1x2x8x8xf32>,
    %55 = arith.truncf %51 : vector<2x8x8xf32> to vector<2x8x8xbf16>
    %56 = arith.truncf %40 : vector<2x8x8xf32> to vector<2x8x8xbf16>
    "tpu.trace_start"() <{level = 10 : i32, message = "bqk,bkd->bqd"}> : () -> ()
    %cst_21 = arith.constant dense<0.000000e+00> : vector<2x8x8xf32>
    %57 = tpu.matmul %55, %56, %cst_21 {dimension_numbers = #tpu.dot_dimension_numbers<[2], [1], [1], [2], [0, 0, 0, 1, 1, 2], [0], [0]>} : vector<2x8x8xbf16>, vector<2x8x8xbf16>, vector<2x8x8xf32> -> vector<2x8x8xf32>
    "tpu.trace_stop"() : () -> ()
    %58 = vector.extract_strided_slice %9 {offsets = [0, 16], sizes = [16, 8], strides = [1, 1]} : vector<16x32xf32> to vector<16x8xf32>
    %59 = vector.shape_cast %58 : vector<16x8xf32> to vector<2x8x8xf32>
    %60 = vector.extract_strided_slice %10 {offsets = [0, 16], sizes = [16, 8], strides = [1, 1]} : vector<16x32xf32> to vector<16x8xf32>
    %61 = vector.shape_cast %60 : vector<16x8xf32> to vector<2x8x8xf32>
    %62 = vector.extract_strided_slice %11 {offsets = [0, 16], sizes = [16, 8], strides = [1, 1]} : vector<16x32xf32> to vector<16x8xf32>
    %63 = vector.shape_cast %62 : vector<16x8xf32> to vector<2x8x8xf32>
    "tpu.trace_start"() <{level = 10 : i32, message = "bqd,bkd->bqk"}> : () -> ()
    %cst_22 = arith.constant dense<0.000000e+00> : vector<2x8x8xf32>
    %64 = tpu.matmul %59, %61, %cst_22 {dimension_numbers = #tpu.dot_dimension_numbers<[2], [2], [1], [1], [0, 0, 0, 1, 1, 1], [0], [0]>} : vector<2x8x8xf32>, vector<2x8x8xf32>, vector<2x8x8xf32> -> vector<2x8x8xf32>
    "tpu.trace_stop"() : () -> ()
    %cst_23 = arith.constant dense<0xFF800000> : vector<2x8xf32>
    %65 = vector.multi_reduction <maximumf>, %64, %cst_23 [2] : vector<2x8x8xf32> to vector<2x8xf32>
    %66 = vector.shape_cast %65 : vector<2x8xf32> to vector<2x8x1xf32>
    %67 = vector.broadcast %66 : vector<2x8x1xf32> to vector<2x8x8xf32>
    %68 = arith.subf %64, %67 : vector<2x8x8xf32>
    %69 = math.exp %68 : vector<2x8x8xf32>
    %cst_24 = arith.constant dense<0.000000e+00> : vector<2x8xf32>
    %70 = vector.multi_reduction <add>, %69, %cst_24 [2] : vector<2x8x8xf32> to vector<2x8xf32>
    %71 = vector.shape_cast %70 : vector<2x8xf32> to vector<2x8x1xf32>
    %72 = tpu.reciprocal %71 {approx = true} : vector<2x8x1xf32> -> vector<2x8x1xf32>
    %73 = vector.broadcast %72 : vector<2x8x1xf32> to vector<2x8x8xf32>
    %74 = arith.mulf %69, %73 : vector<2x8x8xf32>
    %c2 = arith.constant 2 : index
    %c0_25 = arith.constant 0 : index
    %c0_26 = arith.constant 0 : index
    %c0_27 = arith.constant 0 : index
    %75 = vector.load %arg7[%c2, %c0_25, %c0_26, %c0_27] : memref<4x2x8x8xf32, #tpu.memory_space<vmem>>, vector<1x2x8x8xf32>
    %76 = vector.shape_cast %75 : vector<1x2x8x8xf32> to vector<2x8x8xf32>
    %77 = vector.shape_cast %74 : vector<2x8x8xf32> to vector<1x2x8x8xf32>
    tpu.vector_store %arg7[%c2, %c0_25, %c0_26, %c0_27], %77 {strides = array<i32>} : memref<4x2x8x8xf32, #tpu.memory_space<vmem>>, vector<1x2x8x8xf32>,
    %78 = arith.truncf %74 : vector<2x8x8xf32> to vector<2x8x8xbf16>
    %79 = arith.truncf %63 : vector<2x8x8xf32> to vector<2x8x8xbf16>
    "tpu.trace_start"() <{level = 10 : i32, message = "bqk,bkd->bqd"}> : () -> ()
    %cst_28 = arith.constant dense<0.000000e+00> : vector<2x8x8xf32>
    %80 = tpu.matmul %78, %79, %cst_28 {dimension_numbers = #tpu.dot_dimension_numbers<[2], [1], [1], [2], [0, 0, 0, 1, 1, 2], [0], [0]>} : vector<2x8x8xbf16>, vector<2x8x8xbf16>, vector<2x8x8xf32> -> vector<2x8x8xf32>
    "tpu.trace_stop"() : () -> ()
    %81 = vector.extract_strided_slice %9 {offsets = [0, 24], sizes = [16, 8], strides = [1, 1]} : vector<16x32xf32> to vector<16x8xf32>
    %82 = vector.shape_cast %81 : vector<16x8xf32> to vector<2x8x8xf32>
    %83 = vector.extract_strided_slice %10 {offsets = [0, 24], sizes = [16, 8], strides = [1, 1]} : vector<16x32xf32> to vector<16x8xf32>
    %84 = vector.shape_cast %83 : vector<16x8xf32> to vector<2x8x8xf32>
    %85 = vector.extract_strided_slice %11 {offsets = [0, 24], sizes = [16, 8], strides = [1, 1]} : vector<16x32xf32> to vector<16x8xf32>
    %86 = vector.shape_cast %85 : vector<16x8xf32> to vector<2x8x8xf32>
    "tpu.trace_start"() <{level = 10 : i32, message = "bqd,bkd->bqk"}> : () -> ()
    %cst_29 = arith.constant dense<0.000000e+00> : vector<2x8x8xf32>
    %87 = tpu.matmul %82, %84, %cst_29 {dimension_numbers = #tpu.dot_dimension_numbers<[2], [2], [1], [1], [0, 0, 0, 1, 1, 1], [0], [0]>} : vector<2x8x8xf32>, vector<2x8x8xf32>, vector<2x8x8xf32> -> vector<2x8x8xf32>
    "tpu.trace_stop"() : () -> ()
    %cst_30 = arith.constant dense<0xFF800000> : vector<2x8xf32>
    %88 = vector.multi_reduction <maximumf>, %87, %cst_30 [2] : vector<2x8x8xf32> to vector<2x8xf32>
    %89 = vector.shape_cast %88 : vector<2x8xf32> to vector<2x8x1xf32>
    %90 = vector.broadcast %89 : vector<2x8x1xf32> to vector<2x8x8xf32>
    %91 = arith.subf %87, %90 : vector<2x8x8xf32>
    %92 = math.exp %91 : vector<2x8x8xf32>
    %cst_31 = arith.constant dense<0.000000e+00> : vector<2x8xf32>
    %93 = vector.multi_reduction <add>, %92, %cst_31 [2] : vector<2x8x8xf32> to vector<2x8xf32>
    %94 = vector.shape_cast %93 : vector<2x8xf32> to vector<2x8x1xf32>
    %95 = tpu.reciprocal %94 {approx = true} : vector<2x8x1xf32> -> vector<2x8x1xf32>
    %96 = vector.broadcast %95 : vector<2x8x1xf32> to vector<2x8x8xf32>
    %97 = arith.mulf %92, %96 : vector<2x8x8xf32>
    %c3 = arith.constant 3 : index
    %c0_32 = arith.constant 0 : index
    %c0_33 = arith.constant 0 : index
    %c0_34 = arith.constant 0 : index
    %98 = vector.load %arg7[%c3, %c0_32, %c0_33, %c0_34] : memref<4x2x8x8xf32, #tpu.memory_space<vmem>>, vector<1x2x8x8xf32>
    %99 = vector.shape_cast %98 : vector<1x2x8x8xf32> to vector<2x8x8xf32>
    %100 = vector.shape_cast %97 : vector<2x8x8xf32> to vector<1x2x8x8xf32>
    tpu.vector_store %arg7[%c3, %c0_32, %c0_33, %c0_34], %100 {strides = array<i32>} : memref<4x2x8x8xf32, #tpu.memory_space<vmem>>, vector<1x2x8x8xf32>,
    %101 = arith.truncf %97 : vector<2x8x8xf32> to vector<2x8x8xbf16>
    %102 = arith.truncf %86 : vector<2x8x8xf32> to vector<2x8x8xbf16>
    "tpu.trace_start"() <{level = 10 : i32, message = "bqk,bkd->bqd"}> : () -> ()
    %cst_35 = arith.constant dense<0.000000e+00> : vector<2x8x8xf32>
    %103 = tpu.matmul %101, %102, %cst_35 {dimension_numbers = #tpu.dot_dimension_numbers<[2], [1], [1], [2], [0, 0, 0, 1, 1, 2], [0], [0]>} : vector<2x8x8xbf16>, vector<2x8x8xbf16>, vector<2x8x8xf32> -> vector<2x8x8xf32>
    "tpu.trace_stop"() : () -> ()
    %104 = tpu.concatenate %34, %57, %80, %103 in 2 : vector<2x8x8xf32>, vector<2x8x8xf32>, vector<2x8x8xf32>, vector<2x8x8xf32> -> vector<2x8x32xf32>
    %105 = vector.shape_cast %104 : vector<2x8x32xf32> to vector<16x32xf32>
    %106 = arith.truncf %105 : vector<16x32xf32> to vector<16x32xbf16>
    %c0_36 = arith.constant 0 : index
    %c0_37 = arith.constant 0 : index
    %107 = vector.load %arg4[%c0_36, %c0_37] : memref<32x32xbf16, #tpu.memory_space<vmem>>, vector<32x32xbf16>
    %cst_38 = arith.constant dense<0.000000e+00> : vector<16x32xf32>
    %108 = tpu.matmul %106, %107, %cst_38 {dimension_numbers = #tpu.dot_dimension_numbers<[1], [0], [0], [1], [0, 0, 1, 1], [], []>} : vector<16x32xbf16>, vector<32x32xbf16>, vector<16x32xf32> -> vector<16x32xf32>
    %c0_39 = arith.constant 0 : index
    %c0_40 = arith.constant 0 : index
    %109 = vector.load %arg5[%c0_39, %c0_40] : memref<1x32xf32, #tpu.memory_space<vmem>>, vector<1x32xf32>
    %110 = vector.broadcast %109 : vector<1x32xf32> to vector<16x32xf32>
    %111 = arith.addf %108, %110 : vector<16x32xf32>
    %112 = vector.shape_cast %111 : vector<16x32xf32> to vector<2x8x32xf32>
    %c0_41 = arith.constant 0 : index
    %c0_42 = arith.constant 0 : index
    %c0_43 = arith.constant 0 : index
    %113 = vector.load %arg6[%c0_41, %c0_42, %c0_43] : memref<2x8x32xf32, #tpu.memory_space<vmem>>, vector<2x8x32xf32>
    tpu.vector_store %arg6[%c0_41, %c0_42, %c0_43], %112 {strides = array<i32>} : memref<2x8x32xf32, #tpu.memory_space<vmem>>, vector<2x8x32xf32>,
    return
  }
  func.func @transform_0(%arg0: i32) -> (i32, i32, i32) {
    %c0_i32 = arith.constant 0 : i32
    %c0_i32_0 = arith.constant 0 : i32
    %c0_i32_1 = arith.constant 0 : i32
    return %arg0, %c0_i32, %c0_i32_0 : i32, i32, i32
  }
  func.func @transform_1(%arg0: i32) -> (i32, i32) {
    %c0_i32 = arith.constant 0 : i32
    %c0_i32_0 = arith.constant 0 : i32
    %c0_i32_1 = arith.constant 0 : i32
    return %c0_i32, %c0_i32_0 : i32, i32
  }
  func.func @transform_2(%arg0: i32) -> (i32, i32) {
    %c0_i32 = arith.constant 0 : i32
    %c0_i32_0 = arith.constant 0 : i32
    %c0_i32_1 = arith.constant 0 : i32
    return %c0_i32, %c0_i32_0 : i32, i32
  }
  func.func @transform_3(%arg0: i32) -> (i32, i32) {
    %c0_i32 = arith.constant 0 : i32
    %c0_i32_0 = arith.constant 0 : i32
    %c0_i32_1 = arith.constant 0 : i32
    return %c0_i32, %c0_i32_0 : i32, i32
  }
  func.func @transform_4(%arg0: i32) -> (i32, i32) {
    %c0_i32 = arith.constant 0 : i32
    %c0_i32_0 = arith.constant 0 : i32
    %c0_i32_1 = arith.constant 0 : i32
    return %c0_i32, %c0_i32_0 : i32, i32
  }
  func.func @transform_5(%arg0: i32) -> (i32, i32, i32) {
    %c0_i32 = arith.constant 0 : i32
    %c0_i32_0 = arith.constant 0 : i32
    %c0_i32_1 = arith.constant 0 : i32
    return %arg0, %c0_i32, %c0_i32_0 : i32, i32, i32
  }
  func.func @transform_6(%arg0: i32) -> (i32, i32, i32, i32) {
    %c0_i32 = arith.constant 0 : i32
    %c0_i32_0 = arith.constant 0 : i32
    %c0_i32_1 = arith.constant 0 : i32
    %c0_i32_2 = arith.constant 0 : i32
    return %c0_i32, %arg0, %c0_i32_0, %c0_i32_1 : i32, i32, i32, i32
  }
}

</mosaic_0001>

<llo_original>
// kernel: tpu_custom_call.1
$region0: #{tpu_custom_call.1}
  #allocation0 [shape = 'u32[]', space=smem, size = 0x4, offset = 0x4, fixed_abs, tag = 'smem constant byte address 0x4 - core index']
  #allocation1 [shape = 'u32[72,128]{1,0:T(1,128)}', space=vmem, size = 0x9000, scoped, tag = 'internal scratch']
  %s0 = inlined_call_operand.hbm [shape: bf16[2,8,32], index: 0, kind: input, shape index: {}]
  %s1 = inlined_call_operand.hbm [shape: bf16[32,96], index: 1, kind: input, shape index: {}]
  %s2 = inlined_call_operand.vmem [shape: f32[1,96], index: 2, kind: input, shape index: {}]
  %s3 = inlined_call_operand.hbm [shape: bf16[32,32], index: 3, kind: input, shape index: {}]
  %s4 = inlined_call_operand.vmem [shape: f32[1,32], index: 4, kind: input, shape index: {}]
  %s5 = inlined_call_operand.hbm [shape: f32[2,8,32], index: 5, kind: output, shape index: {0}]
  %s6 = inlined_call_operand.hbm [shape: f32[4,2,8,8], index: 6, kind: output, shape index: {1}]
  %7 = xla_tuple %s5, %s6
  %s8 = sld [smem:[#allocation0]]
  $region50: #{tpu_custom_call.1} parent=0
    _
  %s10 = ssub.s32 1, %s8
  %s11 = scalar_select 0, %s10, %s8
  $region1: #{tpu_custom_call.1} parent=0
    #allocation2 [shape = 'u8[4096]{0}', space=vmem, size = 0x1000, scoped, tag = 'input window, operand 0, single buffered']
    #allocation3 [shape = 's32[1]{0}', space=sflag, size = 0x4, scoped, tag = 'scoped memory for tpu_custom_call.1']
    #allocation4 [shape = 's32[1]{0}', space=sflag, size = 0x4, scoped, tag = 'scoped memory for tpu_custom_call.1']
    #allocation5 [shape = 'u8[8192]{0}', space=vmem, size = 0x2000, scoped, tag = 'input window, operand 1, single buffered']
    #allocation6 [shape = 's32[1]{0}', space=sflag, size = 0x4, scoped, tag = 'scoped memory for tpu_custom_call.1']
    #allocation7 [shape = 'u8[8192]{0}', space=vmem, size = 0x2000, scoped, tag = 'input window, operand 3, single buffered']
    #allocation8 [shape = 'u8[8192]{0}', space=vmem, size = 0x2000, scoped, tag = 'output window, operand 0, single buffered']
    #allocation9 [shape = 'u8[32768]{0}', space=vmem, size = 0x8000, scoped, tag = 'output window, operand 1, single buffered']
    #allocation10 [shape = 's32[1]{0}', space=sflag, size = 0x4, scoped, tag = 'scoped memory for tpu_custom_call.1']
    %12 = vsyncpa [#allocation3], 0
    %13 = vsyncpa [#allocation6], 0
    %14 = vsyncpa [#allocation4], 0
    %15 = vsyncpa [#allocation10], 0
    // Predicated region
    $region2: #{tpu_custom_call.1} parent=1 // pred_check
      _
    $region3: #{tpu_custom_call.1} parent=1 // pred_check_branch
      %17 = sbr.rel (0) target = $region5
    $region4: #{tpu_custom_call.1} parent=1 // pred_region
      %19 = vsyncadd [#allocation3], 0
      %s20 = sshll.u32 %s0, 4
      %s21 = int_to_ptr.hbm [resolvable:$true] %s20
      %s22 = sshll.u32 [#allocation2], 4
      %s23 = int_to_ptr.vmem [resolvable:$true] %s22
      %28 = dma.hbm_to_vmem [thread:$0]  %s21, 128, %s23, [#allocation3], 64, 64, 4
    $region5: #{tpu_custom_call.1} parent=1 // pred_fallthru
      _
    // Predicated region
    $region6: #{tpu_custom_call.1} parent=1 // pred_check
      _
    $region7: #{tpu_custom_call.1} parent=1 // pred_check_branch
      %30 = sbr.rel (0) target = $region9
    $region8: #{tpu_custom_call.1} parent=1 // pred_region
      %32 = vsyncadd [#allocation6], 0
      %s33 = sshll.u32 %s1, 4
      %s34 = int_to_ptr.hbm [resolvable:$true] %s33
      %s35 = sshll.u32 [#allocation5], 4
      %s36 = int_to_ptr.vmem [resolvable:$true] %s35
      %41 = dma.hbm_to_vmem [thread:$0]  %s34, 256, %s36, [#allocation6], 64, 64, 4
    $region9: #{tpu_custom_call.1} parent=1 // pred_fallthru
      _
    // Predicated region
    $region10: #{tpu_custom_call.1} parent=1 // pred_check
      _
    $region11: #{tpu_custom_call.1} parent=1 // pred_check_branch
      %43 = sbr.rel (0) target = $region13
    $region12: #{tpu_custom_call.1} parent=1 // pred_region
      _
    $region13: #{tpu_custom_call.1} parent=1 // pred_fallthru
      _
    // Predicated region
    $region14: #{tpu_custom_call.1} parent=1 // pred_check
      _
    $region15: #{tpu_custom_call.1} parent=1 // pred_check_branch
      %45 = sbr.rel (0) target = $region17
    $region16: #{tpu_custom_call.1} parent=1 // pred_region
      %47 = vsyncadd [#allocation6], 0
      %s48 = sshll.u32 %s3, 4
      %s49 = int_to_ptr.hbm [resolvable:$true] %s48
      %s50 = sshll.u32 [#allocation7], 4
      %s51 = int_to_ptr.vmem [resolvable:$true] %s50
      %56 = dma.hbm_to_vmem [thread:$0]  %s49, 256, %s51, [#allocation6], 64, 64, 4
    $region17: #{tpu_custom_call.1} parent=1 // pred_fallthru
      _
    // Predicated region
    $region18: #{tpu_custom_call.1} parent=1 // pred_check
      _
    $region19: #{tpu_custom_call.1} parent=1 // pred_check_branch
      %58 = sbr.rel (0) target = $region21
    $region20: #{tpu_custom_call.1} parent=1 // pred_region
      _
    $region21: #{tpu_custom_call.1} parent=1 // pred_fallthru
      _
    // Predicated region
    $region22: #{tpu_custom_call.1} parent=1 // pred_check
      _
    $region23: #{tpu_custom_call.1} parent=1 // pred_check_branch
      %60 = sbr.rel (0) target = $region25
    $region24: #{tpu_custom_call.1} parent=1 // pred_region
      %62 = dma.done [#allocation3], 128
    $region25: #{tpu_custom_call.1} parent=1 // pred_fallthru
      _
    // Predicated region
    $region26: #{tpu_custom_call.1} parent=1 // pred_check
      _
    $region27: #{tpu_custom_call.1} parent=1 // pred_check_branch
      %64 = sbr.rel (0) target = $region29
    $region28: #{tpu_custom_call.1} parent=1 // pred_region
      %66 = dma.done [#allocation6], 256
    $region29: #{tpu_custom_call.1} parent=1 // pred_fallthru
      _
    // Predicated region
    $region30: #{tpu_custom_call.1} parent=1 // pred_check
      _
    $region31: #{tpu_custom_call.1} parent=1 // pred_check_branch
      %68 = sbr.rel (0) target = $region33
    $region32: #{tpu_custom_call.1} parent=1 // pred_region
      %70 = dma.done [#allocation6], 256
    $region33: #{tpu_custom_call.1} parent=1 // pred_fallthru
      _
    %v72 = vld [vmem:[#allocation2] sm:$0xf]
    %v73 = vld [vmem:[#allocation2 + $0x4] sm:$0xf]
    %v74 = vld [vmem:[#allocation5] sm:$0xf]
    %v75 = vld [vmem:[#allocation5 + $0x4] sm:$0xf]
    %v76 = vld [vmem:[#allocation5 + $0x8] sm:$0xf]
    %v77 = vld [vmem:[#allocation5 + $0xc] sm:$0xf]
    %v78 = vld [vmem:[%s2] sm:$0x1]
    %v80 = vperm.slane %v78, 0
    %v84 = vunpack.c.l.b16 %v72
    %v85 = vunpack.c.l.b16 %v73
    %v86 = vpack.c.b16 %v85, %v84
    %v91 = vunpack.c.l.b16 %v74
    %v92 = vunpack.c.l.b16 %v75
    %v93 = vunpack.c.l.b16 %v76
    %v94 = vunpack.c.l.b16 %v77
    %v95 = vpack.c.b16 %v92, %v91
    %v96 = vpack.c.b16 %v94, %v93
    %vm99 = vcmask 261120
    %v101 = vsel %vm99, %v86, 0
    %103 = vmatpush.bf16.msra.mxu0 0
    %104 = vmatpush.bf16.msra.mxu0 0
    %105 = vmatpush.bf16.msra.mxu0 0
    %106 = vmatpush.bf16.msra.mxu0 0
    %107 = vmatpush.bf16.msra.mxu0 0
    %108 = vmatpush.bf16.msra.mxu0 0
    %109 = vmatpush.bf16.msra.mxu0 %v96
    %110 = vmatpush.bf16.msra.mxu0 %v95
    %111 = vmatmul.bf16.gmra.mxu0 %v101
    %v112 = vpop.f32.mrf.mxu0
    %v113 = vadd.f32 %v80, %v112
    %v114 = vpop.f32.mrf.mxu0
    %v115 = vadd.f32 %v80, %v114
    %116 = vdwg.mxu0
    %v117 = vmul.f32 %v113, 0.35355338
    %v118 = vmul.f32 %v115, 0.35355338
    %120 = vrot.lane.b32.xlu0 %v113, 96
    %v121 = vpop.permute.xlu0 %120
    %vm122 = vcmask 64512
    %v124 = vsel %vm122, %v117, 0
    %v126 = vsel %vm122, %v121, 0
    %128 = vmatpush.xpose.msra.mxu0 0.0
    %129 = vmatpush.xpose.msra.mxu0 0.0
    %130 = vmatpush.xpose.msra.mxu0 0.0
    %131 = vmatpush.xpose.msra.mxu0 0.0
    %132 = vmatpush.xpose.msra.mxu0 0.0
    %133 = vmatpush.xpose.msra.mxu0 0.0
    %134 = vmatpush.xpose.msra.mxu0 0.0
    %135 = vmatpush.xpose.msra.mxu0 0.0
    %136 = vmatpush.xpose.msra.mxu0 0.0
    %137 = vmatpush.xpose.msra.mxu0 0.0
    %138 = vmatpush.xpose.msra.mxu0 0.0
    %139 = vmatpush.xpose.msra.mxu0 0.0
    %140 = vmatpush.xpose.msra.mxu0 0.0
    %141 = vmatpush.xpose.msra.mxu0 0.0
    %142 = vmatpush.xpose.msra.mxu0 0.0
    %143 = vmatpush.xpose.msra.mxu0 %v126
    %144 = vmatmul.f32.gmra.mxu0 %v124
    %v145 = vpop.f32.mrf.mxu0
    %v146 = vadd.f32 0.0, %v145
    %147 = vdwg.mxu0
    %149 = vrot.lane.b32.xlu0 %v115, 96
    %v150 = vpop.permute.xlu0 %149
    %v152 = vsel %vm122, %v118, 0
    %v154 = vsel %vm122, %v150, 0
    %156 = vmatpush.xpose.msra.mxu0 0.0
    %157 = vmatpush.xpose.msra.mxu0 0.0
    %158 = vmatpush.xpose.msra.mxu0 0.0
    %159 = vmatpush.xpose.msra.mxu0 0.0
    %160 = vmatpush.xpose.msra.mxu0 0.0
    %161 = vmatpush.xpose.msra.mxu0 0.0
    %162 = vmatpush.xpose.msra.mxu0 0.0
    %163 = vmatpush.xpose.msra.mxu0 0.0
    %164 = vmatpush.xpose.msra.mxu0 0.0
    %165 = vmatpush.xpose.msra.mxu0 0.0
    %166 = vmatpush.xpose.msra.mxu0 0.0
    %167 = vmatpush.xpose.msra.mxu0 0.0
    %168 = vmatpush.xpose.msra.mxu0 0.0
    %169 = vmatpush.xpose.msra.mxu0 0.0
    %170 = vmatpush.xpose.msra.mxu0 0.0
    %171 = vmatpush.xpose.msra.mxu0 %v154
    %172 = vmatmul.f32.gmra.mxu0 %v152
    %v173 = vpop.f32.mrf.mxu0
    %v174 = vadd.f32 0.0, %v173
    %175 = vdwg.mxu0
    %v176 = vsel %vm122, %v146, -inf
    %177 = vmax.xlane.f32.xlu0 %v176
    %v178 = vpop.xlane.xlu0 %177
    %v179 = vsel %vm122, %v174, -inf
    %180 = vmax.xlane.f32.xlu0 %v179
    %v181 = vpop.xlane.xlu0 %180
    %v182 = vsub.f32 %v146, %v178
    %v183 = vsub.f32 %v174, %v181
    %v184 = vmul.f32 %v182, 1.442695
    %v185 = vpow.pop %v184
    %v186 = vmul.f32 %v183, 1.442695
    %v187 = vpow.pop %v186
    %v188 = vsel %vm122, %v185, 0.0
    %189 = vadd.xlane.f32.xlu0 %v188
    %v190 = vpop.xlane.xlu0 %189
    %v191 = vsel %vm122, %v187, 0.0
    %192 = vadd.xlane.f32.xlu0 %v191
    %v193 = vpop.xlane.xlu0 %192
    %v194 = vrcp.pop %v190
    %v195 = vrcp.pop %v193
    %v196 = vmul.f32 %v185, %v194
    %v197 = vmul.f32 %v187, %v195
    %198 = vst.msk [vmem:[#allocation9] sm:$0xff] %vm122, %v196
    %199 = vst.msk [vmem:[#allocation9 + $0x8] sm:$0xff] %vm122, %v197
    %v200 = vpack.c.bf16 %v196, %v196
    %v201 = vpack.c.bf16 %v197, %v197
    %v202 = vpack.c.bf16 %v113, %v113
    %v203 = vpack.c.bf16 %v115, %v115
    %v205 = vunpack.c.l.b16 %v202
    %v206 = vpack.c.b16 %v205, %v205
    %207 = vrot.lane.b32.xlu0 %v206, 64
    %v208 = vpop.permute.xlu0 %207
    %v210 = vsel %vm122, %v200, 0
    %vm212 = vcmask 1043456
    %v214 = vsel %vm212, %v208, 0
    %216 = vmatpush.bf16.msra.mxu0 0
    %217 = vmatpush.bf16.msra.mxu0 0
    %218 = vmatpush.bf16.msra.mxu0 0
    %219 = vmatpush.bf16.msra.mxu0 0
    %220 = vmatpush.bf16.msra.mxu0 0
    %221 = vmatpush.bf16.msra.mxu0 0
    %222 = vmatpush.bf16.msra.mxu0 0
    %223 = vmatpush.bf16.msra.mxu0 %v214
    %224 = vmatmul.bf16.gmra.mxu0 %v210
    %v225 = vpop.f32.mrf.mxu0
    %v226 = vadd.f32 0.0, %v225
    %v227 = vpop.f32.mrf.mxu0
    %228 = vdwg.mxu0
    %v230 = vunpack.c.l.b16 %v203
    %v231 = vpack.c.b16 %v230, %v230
    %232 = vrot.lane.b32.xlu0 %v231, 64
    %v233 = vpop.permute.xlu0 %232
    %v235 = vsel %vm122, %v201, 0
    %v238 = vsel %vm212, %v233, 0
    %240 = vmatpush.bf16.msra.mxu0 0
    %241 = vmatpush.bf16.msra.mxu0 0
    %242 = vmatpush.bf16.msra.mxu0 0
    %243 = vmatpush.bf16.msra.mxu0 0
    %244 = vmatpush.bf16.msra.mxu0 0
    %245 = vmatpush.bf16.msra.mxu0 0
    %246 = vmatpush.bf16.msra.mxu0 0
    %247 = vmatpush.bf16.msra.mxu0 %v238
    %248 = vmatmul.bf16.gmra.mxu0 %v235
    %v249 = vpop.f32.mrf.mxu0
    %v250 = vadd.f32 0.0, %v249
    %v251 = vpop.f32.mrf.mxu0
    %252 = vdwg.mxu0
    %253 = vrot.lane.b32.xlu0 %v117, 120
    %v254 = vpop.permute.xlu0 %253
    %255 = vrot.lane.b32.xlu0 %v113, 88
    %v256 = vpop.permute.xlu0 %255
    %v257 = vsel %vm122, %v254, 0
    %v259 = vsel %vm122, %v256, 0
    %261 = vmatpush.xpose.msra.mxu0 0.0
    %262 = vmatpush.xpose.msra.mxu0 0.0
    %263 = vmatpush.xpose.msra.mxu0 0.0
    %264 = vmatpush.xpose.msra.mxu0 0.0
    %265 = vmatpush.xpose.msra.mxu0 0.0
    %266 = vmatpush.xpose.msra.mxu0 0.0
    %267 = vmatpush.xpose.msra.mxu0 0.0
    %268 = vmatpush.xpose.msra.mxu0 0.0
    %269 = vmatpush.xpose.msra.mxu0 0.0
    %270 = vmatpush.xpose.msra.mxu0 0.0
    %271 = vmatpush.xpose.msra.mxu0 0.0
    %272 = vmatpush.xpose.msra.mxu0 0.0
    %273 = vmatpush.xpose.msra.mxu0 0.0
    %274 = vmatpush.xpose.msra.mxu0 0.0
    %275 = vmatpush.xpose.msra.mxu0 0.0
    %276 = vmatpush.xpose.msra.mxu0 %v259
    %277 = vmatmul.f32.gmra.mxu0 %v257
    %v278 = vpop.f32.mrf.mxu0
    %v279 = vadd.f32 0.0, %v278
    %280 = vdwg.mxu0
    %281 = vrot.lane.b32.xlu0 %v118, 120
    %v282 = vpop.permute.xlu0 %281
    %283 = vrot.lane.b32.xlu0 %v115, 88
    %v284 = vpop.permute.xlu0 %283
    %v285 = vsel %vm122, %v282, 0
    %v287 = vsel %vm122, %v284, 0
    %289 = vmatpush.xpose.msra.mxu0 0.0
    %290 = vmatpush.xpose.msra.mxu0 0.0
    %291 = vmatpush.xpose.msra.mxu0 0.0
    %292 = vmatpush.xpose.msra.mxu0 0.0
    %293 = vmatpush.xpose.msra.mxu0 0.0
    %294 = vmatpush.xpose.msra.mxu0 0.0
    %295 = vmatpush.xpose.msra.mxu0 0.0
    %296 = vmatpush.xpose.msra.mxu0 0.0
    %297 = vmatpush.xpose.msra.mxu0 0.0
    %298 = vmatpush.xpose.msra.mxu0 0.0
    %299 = vmatpush.xpose.msra.mxu0 0.0
    %300 = vmatpush.xpose.msra.mxu0 0.0
    %301 = vmatpush.xpose.msra.mxu0 0.0
    %302 = vmatpush.xpose.msra.mxu0 0.0
    %303 = vmatpush.xpose.msra.mxu0 0.0
    %304 = vmatpush.xpose.msra.mxu0 %v287
    %305 = vmatmul.f32.gmra.mxu0 %v285
    %v306 = vpop.f32.mrf.mxu0
    %v307 = vadd.f32 0.0, %v306
    %308 = vdwg.mxu0
    %v309 = vsel %vm122, %v279, -inf
    %310 = vmax.xlane.f32.xlu0 %v309
    %v311 = vpop.xlane.xlu0 %310
    %v312 = vsel %vm122, %v307, -inf
    %313 = vmax.xlane.f32.xlu0 %v312
    %v314 = vpop.xlane.xlu0 %313
    %v315 = vsub.f32 %v279, %v311
    %v316 = vsub.f32 %v307, %v314
    %v317 = vmul.f32 %v315, 1.442695
    %v318 = vpow.pop %v317
    %v319 = vmul.f32 %v316, 1.442695
    %v320 = vpow.pop %v319
    %v321 = vsel %vm122, %v318, 0.0
    %322 = vadd.xlane.f32.xlu0 %v321
    %v323 = vpop.xlane.xlu0 %322
    %v324 = vsel %vm122, %v320, 0.0
    %325 = vadd.xlane.f32.xlu0 %v324
    %v326 = vpop.xlane.xlu0 %325
    %v327 = vrcp.pop %v323
    %v328 = vrcp.pop %v326
    %v329 = vmul.f32 %v318, %v327
    %v330 = vmul.f32 %v320, %v328
    %s331 = scalar_lea.vmem [#allocation9], 16
    %332 = vst.msk [vmem:[%s331] sm:$0xff] %vm122, %v329
    %333 = vst.msk [vmem:[%s331 + $0x8] sm:$0xff] %vm122, %v330
    %v334 = vpack.c.bf16 %v329, %v329
    %v335 = vpack.c.bf16 %v330, %v330
    %336 = vrot.lane.b32.xlu0 %v206, 56
    %v337 = vpop.permute.xlu0 %336
    %v339 = vsel %vm122, %v334, 0
    %v342 = vsel %vm212, %v337, 0
    %344 = vmatpush.bf16.msra.mxu0 0
    %345 = vmatpush.bf16.msra.mxu0 0
    %346 = vmatpush.bf16.msra.mxu0 0
    %347 = vmatpush.bf16.msra.mxu0 0
    %348 = vmatpush.bf16.msra.mxu0 0
    %349 = vmatpush.bf16.msra.mxu0 0
    %350 = vmatpush.bf16.msra.mxu0 0
    %351 = vmatpush.bf16.msra.mxu0 %v342
    %352 = vmatmul.bf16.gmra.mxu0 %v339
    %v353 = vpop.f32.mrf.mxu0
    %v354 = vadd.f32 0.0, %v353
    %v355 = vpop.f32.mrf.mxu0
    %356 = vdwg.mxu0
    %357 = vrot.lane.b32.xlu0 %v231, 56
    %v358 = vpop.permute.xlu0 %357
    %v360 = vsel %vm122, %v335, 0
    %v363 = vsel %vm212, %v358, 0
    %365 = vmatpush.bf16.msra.mxu0 0
    %366 = vmatpush.bf16.msra.mxu0 0
    %367 = vmatpush.bf16.msra.mxu0 0
    %368 = vmatpush.bf16.msra.mxu0 0
    %369 = vmatpush.bf16.msra.mxu0 0
    %370 = vmatpush.bf16.msra.mxu0 0
    %371 = vmatpush.bf16.msra.mxu0 0
    %372 = vmatpush.bf16.msra.mxu0 %v363
    %373 = vmatmul.bf16.gmra.mxu0 %v360
    %v374 = vpop.f32.mrf.mxu0
    %v375 = vadd.f32 0.0, %v374
    %v376 = vpop.f32.mrf.mxu0
    %377 = vdwg.mxu0
    %378 = vrot.lane.b32.xlu0 %v117, 112
    %v379 = vpop.permute.xlu0 %378
    %380 = vrot.lane.b32.xlu0 %v113, 80
    %v381 = vpop.permute.xlu0 %380
    %v382 = vsel %vm122, %v379, 0
    %v384 = vsel %vm122, %v381, 0
    %386 = vmatpush.xpose.msra.mxu0 0.0
    %387 = vmatpush.xpose.msra.mxu0 0.0
    %388 = vmatpush.xpose.msra.mxu0 0.0
    %389 = vmatpush.xpose.msra.mxu0 0.0
    %390 = vmatpush.xpose.msra.mxu0 0.0
    %391 = vmatpush.xpose.msra.mxu0 0.0
    %392 = vmatpush.xpose.msra.mxu0 0.0
    %393 = vmatpush.xpose.msra.mxu0 0.0
    %394 = vmatpush.xpose.msra.mxu0 0.0
    %395 = vmatpush.xpose.msra.mxu0 0.0
    %396 = vmatpush.xpose.msra.mxu0 0.0
    %397 = vmatpush.xpose.msra.mxu0 0.0
    %398 = vmatpush.xpose.msra.mxu0 0.0
    %399 = vmatpush.xpose.msra.mxu0 0.0
    %400 = vmatpush.xpose.msra.mxu0 0.0
    %401 = vmatpush.xpose.msra.mxu0 %v384
    %402 = vmatmul.f32.gmra.mxu0 %v382
    %v403 = vpop.f32.mrf.mxu0
    %v404 = vadd.f32 0.0, %v403
    %405 = vdwg.mxu0
    %406 = vrot.lane.b32.xlu0 %v118, 112
    %v407 = vpop.permute.xlu0 %406
    %408 = vrot.lane.b32.xlu0 %v115, 80
    %v409 = vpop.permute.xlu0 %408
    %v410 = vsel %vm122, %v407, 0
    %v412 = vsel %vm122, %v409, 0
    %414 = vmatpush.xpose.msra.mxu0 0.0
    %415 = vmatpush.xpose.msra.mxu0 0.0
    %416 = vmatpush.xpose.msra.mxu0 0.0
    %417 = vmatpush.xpose.msra.mxu0 0.0
    %418 = vmatpush.xpose.msra.mxu0 0.0
    %419 = vmatpush.xpose.msra.mxu0 0.0
    %420 = vmatpush.xpose.msra.mxu0 0.0
    %421 = vmatpush.xpose.msra.mxu0 0.0
    %422 = vmatpush.xpose.msra.mxu0 0.0
    %423 = vmatpush.xpose.msra.mxu0 0.0
    %424 = vmatpush.xpose.msra.mxu0 0.0
    %425 = vmatpush.xpose.msra.mxu0 0.0
    %426 = vmatpush.xpose.msra.mxu0 0.0
    %427 = vmatpush.xpose.msra.mxu0 0.0
    %428 = vmatpush.xpose.msra.mxu0 0.0
    %429 = vmatpush.xpose.msra.mxu0 %v412
    %430 = vmatmul.f32.gmra.mxu0 %v410
    %v431 = vpop.f32.mrf.mxu0
    %v432 = vadd.f32 0.0, %v431
    %433 = vdwg.mxu0
    %v434 = vsel %vm122, %v404, -inf
    %435 = vmax.xlane.f32.xlu0 %v434
    %v436 = vpop.xlane.xlu0 %435
    %v437 = vsel %vm122, %v432, -inf
    %438 = vmax.xlane.f32.xlu0 %v437
    %v439 = vpop.xlane.xlu0 %438
    %v440 = vsub.f32 %v404, %v436
    %v441 = vsub.f32 %v432, %v439
    %v442 = vmul.f32 %v440, 1.442695
    %v443 = vpow.pop %v442
    %v444 = vmul.f32 %v441, 1.442695
    %v445 = vpow.pop %v444
    %v446 = vsel %vm122, %v443, 0.0
    %447 = vadd.xlane.f32.xlu0 %v446
    %v448 = vpop.xlane.xlu0 %447
    %v449 = vsel %vm122, %v445, 0.0
    %450 = vadd.xlane.f32.xlu0 %v449
    %v451 = vpop.xlane.xlu0 %450
    %v452 = vrcp.pop %v448
    %v453 = vrcp.pop %v451
    %v454 = vmul.f32 %v443, %v452
    %v455 = vmul.f32 %v445, %v453
    %s456 = scalar_lea.vmem [#allocation9], 32
    %457 = vst.msk [vmem:[%s456] sm:$0xff] %vm122, %v454
    %458 = vst.msk [vmem:[%s456 + $0x8] sm:$0xff] %vm122, %v455
    %v459 = vpack.c.bf16 %v454, %v454
    %v460 = vpack.c.bf16 %v455, %v455
    %461 = vrot.lane.b32.xlu0 %v206, 48
    %v462 = vpop.permute.xlu0 %461
    %v464 = vsel %vm122, %v459, 0
    %v467 = vsel %vm212, %v462, 0
    %469 = vmatpush.bf16.msra.mxu0 0
    %470 = vmatpush.bf16.msra.mxu0 0
    %471 = vmatpush.bf16.msra.mxu0 0
    %472 = vmatpush.bf16.msra.mxu0 0
    %473 = vmatpush.bf16.msra.mxu0 0
    %474 = vmatpush.bf16.msra.mxu0 0
    %475 = vmatpush.bf16.msra.mxu0 0
    %476 = vmatpush.bf16.msra.mxu0 %v467
    %477 = vmatmul.bf16.gmra.mxu0 %v464
    %v478 = vpop.f32.mrf.mxu0
    %v479 = vadd.f32 0.0, %v478
    %v480 = vpop.f32.mrf.mxu0
    %481 = vdwg.mxu0
    %482 = vrot.lane.b32.xlu0 %v231, 48
    %v483 = vpop.permute.xlu0 %482
    %v485 = vsel %vm122, %v460, 0
    %v488 = vsel %vm212, %v483, 0
    %490 = vmatpush.bf16.msra.mxu0 0
    %491 = vmatpush.bf16.msra.mxu0 0
    %492 = vmatpush.bf16.msra.mxu0 0
    %493 = vmatpush.bf16.msra.mxu0 0
    %494 = vmatpush.bf16.msra.mxu0 0
    %495 = vmatpush.bf16.msra.mxu0 0
    %496 = vmatpush.bf16.msra.mxu0 0
    %497 = vmatpush.bf16.msra.mxu0 %v488
    %498 = vmatmul.bf16.gmra.mxu0 %v485
    %v499 = vpop.f32.mrf.mxu0
    %v500 = vadd.f32 0.0, %v499
    %v501 = vpop.f32.mrf.mxu0
    %502 = vdwg.mxu0
    %503 = vrot.lane.b32.xlu0 %v117, 104
    %v504 = vpop.permute.xlu0 %503
    %505 = vrot.lane.b32.xlu0 %v113, 72
    %v506 = vpop.permute.xlu0 %505
    %v507 = vsel %vm122, %v504, 0
    %v509 = vsel %vm122, %v506, 0
    %511 = vmatpush.xpose.msra.mxu0 0.0
    %512 = vmatpush.xpose.msra.mxu0 0.0
    %513 = vmatpush.xpose.msra.mxu0 0.0
    %514 = vmatpush.xpose.msra.mxu0 0.0
    %515 = vmatpush.xpose.msra.mxu0 0.0
    %516 = vmatpush.xpose.msra.mxu0 0.0
    %517 = vmatpush.xpose.msra.mxu0 0.0
    %518 = vmatpush.xpose.msra.mxu0 0.0
    %519 = vmatpush.xpose.msra.mxu0 0.0
    %520 = vmatpush.xpose.msra.mxu0 0.0
    %521 = vmatpush.xpose.msra.mxu0 0.0
    %522 = vmatpush.xpose.msra.mxu0 0.0
    %523 = vmatpush.xpose.msra.mxu0 0.0
    %524 = vmatpush.xpose.msra.mxu0 0.0
    %525 = vmatpush.xpose.msra.mxu0 0.0
    %526 = vmatpush.xpose.msra.mxu0 %v509
    %527 = vmatmul.f32.gmra.mxu0 %v507
    %v528 = vpop.f32.mrf.mxu0
    %v529 = vadd.f32 0.0, %v528
    %530 = vdwg.mxu0
    %531 = vrot.lane.b32.xlu0 %v118, 104
    %v532 = vpop.permute.xlu0 %531
    %533 = vrot.lane.b32.xlu0 %v115, 72
    %v534 = vpop.permute.xlu0 %533
    %v535 = vsel %vm122, %v532, 0
    %v537 = vsel %vm122, %v534, 0
    %539 = vmatpush.xpose.msra.mxu0 0.0
    %540 = vmatpush.xpose.msra.mxu0 0.0
    %541 = vmatpush.xpose.msra.mxu0 0.0
    %542 = vmatpush.xpose.msra.mxu0 0.0
    %543 = vmatpush.xpose.msra.mxu0 0.0
    %544 = vmatpush.xpose.msra.mxu0 0.0
    %545 = vmatpush.xpose.msra.mxu0 0.0
    %546 = vmatpush.xpose.msra.mxu0 0.0
    %547 = vmatpush.xpose.msra.mxu0 0.0
    %548 = vmatpush.xpose.msra.mxu0 0.0
    %549 = vmatpush.xpose.msra.mxu0 0.0
    %550 = vmatpush.xpose.msra.mxu0 0.0
    %551 = vmatpush.xpose.msra.mxu0 0.0
    %552 = vmatpush.xpose.msra.mxu0 0.0
    %553 = vmatpush.xpose.msra.mxu0 0.0
    %554 = vmatpush.xpose.msra.mxu0 %v537
    %555 = vmatmul.f32.gmra.mxu0 %v535
    %v556 = vpop.f32.mrf.mxu0
    %v557 = vadd.f32 0.0, %v556
    %558 = vdwg.mxu0
    %v559 = vsel %vm122, %v529, -inf
    %560 = vmax.xlane.f32.xlu0 %v559
    %v561 = vpop.xlane.xlu0 %560
    %v562 = vsel %vm122, %v557, -inf
    %563 = vmax.xlane.f32.xlu0 %v562
    %v564 = vpop.xlane.xlu0 %563
    %v565 = vsub.f32 %v529, %v561
    %v566 = vsub.f32 %v557, %v564
    %v567 = vmul.f32 %v565, 1.442695
    %v568 = vpow.pop %v567
    %v569 = vmul.f32 %v566, 1.442695
    %v570 = vpow.pop %v569
    %v571 = vsel %vm122, %v568, 0.0
    %572 = vadd.xlane.f32.xlu0 %v571
    %v573 = vpop.xlane.xlu0 %572
    %v574 = vsel %vm122, %v570, 0.0
    %575 = vadd.xlane.f32.xlu0 %v574
    %v576 = vpop.xlane.xlu0 %575
    %v577 = vrcp.pop %v573
    %v578 = vrcp.pop %v576
    %v579 = vmul.f32 %v568, %v577
    %v580 = vmul.f32 %v570, %v578
    %s581 = scalar_lea.vmem [#allocation9], 48
    %582 = vst.msk [vmem:[%s581] sm:$0xff] %vm122, %v579
    %583 = vst.msk [vmem:[%s581 + $0x8] sm:$0xff] %vm122, %v580
    %v584 = vpack.c.bf16 %v579, %v579
    %v585 = vpack.c.bf16 %v580, %v580
    %586 = vrot.lane.b32.xlu0 %v206, 40
    %v587 = vpop.permute.xlu0 %586
    %v589 = vsel %vm122, %v584, 0
    %v592 = vsel %vm212, %v587, 0
    %594 = vmatpush.bf16.msra.mxu0 0
    %595 = vmatpush.bf16.msra.mxu0 0
    %596 = vmatpush.bf16.msra.mxu0 0
    %597 = vmatpush.bf16.msra.mxu0 0
    %598 = vmatpush.bf16.msra.mxu0 0
    %599 = vmatpush.bf16.msra.mxu0 0
    %600 = vmatpush.bf16.msra.mxu0 0
    %601 = vmatpush.bf16.msra.mxu0 %v592
    %602 = vmatmul.bf16.gmra.mxu0 %v589
    %v603 = vpop.f32.mrf.mxu0
    %v604 = vadd.f32 0.0, %v603
    %v605 = vpop.f32.mrf.mxu0
    %606 = vdwg.mxu0
    %607 = vrot.lane.b32.xlu0 %v231, 40
    %v608 = vpop.permute.xlu0 %607
    %v610 = vsel %vm122, %v585, 0
    %v613 = vsel %vm212, %v608, 0
    %615 = vmatpush.bf16.msra.mxu0 0
    %616 = vmatpush.bf16.msra.mxu0 0
    %617 = vmatpush.bf16.msra.mxu0 0
    %618 = vmatpush.bf16.msra.mxu0 0
    %619 = vmatpush.bf16.msra.mxu0 0
    %620 = vmatpush.bf16.msra.mxu0 0
    %621 = vmatpush.bf16.msra.mxu0 0
    %622 = vmatpush.bf16.msra.mxu0 %v613
    %623 = vmatmul.bf16.gmra.mxu0 %v610
    %v624 = vpop.f32.mrf.mxu0
    %v625 = vadd.f32 0.0, %v624
    %v626 = vpop.f32.mrf.mxu0
    %627 = vdwg.mxu0
    %630 = vrot.lane.b32.xlu0 %v354, 8
    %v631 = vpop.permute.xlu0 %630
    %632 = vrot.lane.b32.xlu0 %v375, 8
    %v633 = vpop.permute.xlu0 %632
    %638 = vrot.lane.b32.xlu0 %v479, 16
    %v639 = vpop.permute.xlu0 %638
    %640 = vrot.lane.b32.xlu0 %v500, 16
    %v641 = vpop.permute.xlu0 %640
    %646 = vrot.lane.b32.xlu0 %v604, 24
    %v647 = vpop.permute.xlu0 %646
    %648 = vrot.lane.b32.xlu0 %v625, 24
    %v649 = vpop.permute.xlu0 %648
    %v652 = vsel %vm122, %v226, %v631
    %v653 = vsel %vm122, %v250, %v633
    %vm654 = vcmask 130048
    %v655 = vsel %vm654, %v652, %v639
    %v656 = vsel %vm654, %v653, %v641
    %vm657 = vcmask 195584
    %v658 = vsel %vm657, %v655, %v647
    %v659 = vsel %vm657, %v656, %v649
    %v660 = vpack.c.bf16 %v659, %v658
    %v661 = vld [vmem:[#allocation7] sm:$0xf]
    %v662 = vld [vmem:[#allocation7 + $0x4] sm:$0xf]
    %v663 = vld [vmem:[#allocation7 + $0x8] sm:$0xf]
    %v664 = vld [vmem:[#allocation7 + $0xc] sm:$0xf]
    %v665 = vld [vmem:[%s4] sm:$0x1]
    %v667 = vperm.slane %v665, 0
    %v673 = vunpack.c.l.b16 %v661
    %v674 = vunpack.c.l.b16 %v662
    %v675 = vunpack.c.l.b16 %v663
    %v676 = vunpack.c.l.b16 %v664
    %v677 = vpack.c.b16 %v674, %v673
    %v678 = vpack.c.b16 %v676, %v675
    %v682 = vsel %vm99, %v660, 0
    %684 = vmatpush.bf16.msra.mxu0 0
    %685 = vmatpush.bf16.msra.mxu0 0
    %686 = vmatpush.bf16.msra.mxu0 0
    %687 = vmatpush.bf16.msra.mxu0 0
    %688 = vmatpush.bf16.msra.mxu0 0
    %689 = vmatpush.bf16.msra.mxu0 0
    %690 = vmatpush.bf16.msra.mxu0 %v678
    %691 = vmatpush.bf16.msra.mxu0 %v677
    %692 = vmatmul.bf16.gmra.mxu0 %v682
    %v693 = vpop.f32.mrf.mxu0
    %v694 = vadd.f32 %v667, %v693
    %v695 = vpop.f32.mrf.mxu0
    %v696 = vadd.f32 %v667, %v695
    %697 = vdwg.mxu0
    %698 = vst.msk [vmem:[#allocation8] sm:$0xff] %vm99, %v694
    %699 = vst.msk [vmem:[#allocation8 + $0x8] sm:$0xff] %vm99, %v696
    // Predicated region
    $region34: #{tpu_custom_call.1} parent=1 // pred_check
      _
    $region35: #{tpu_custom_call.1} parent=1 // pred_check_branch
      %701 = sbr.rel (0) target = $region37
    $region36: #{tpu_custom_call.1} parent=1 // pred_region
      %703 = vsyncadd [#allocation4], 0
      %s704 = sshll.u32 [#allocation8], 4
      %s705 = int_to_ptr.vmem [resolvable:$true] %s704
      %s706 = sshll.u32 %s5, 4
      %s707 = int_to_ptr.hbm [resolvable:$true] %s706
      %712 = dma.vmem_to_hbm [thread:$0]  %s705, 256, %s707, [#allocation4], 128, 128, 8
    $region37: #{tpu_custom_call.1} parent=1 // pred_fallthru
      _
    // Predicated region
    $region38: #{tpu_custom_call.1} parent=1 // pred_check
      _
    $region39: #{tpu_custom_call.1} parent=1 // pred_check_branch
      %714 = sbr.rel (0) target = $region41
    $region40: #{tpu_custom_call.1} parent=1 // pred_region
      %716 = vsyncadd [#allocation10], 0
      %s717 = sshll.u32 [#allocation9], 4
      %s718 = int_to_ptr.vmem [resolvable:$true] %s717
      %s719 = sshll.u32 %s6, 4
      %s720 = int_to_ptr.hbm [resolvable:$true] %s719
      %725 = dma.vmem_to_hbm [thread:$0]  %s718, 1024, %s720, [#allocation10], 128, 128, 8
    $region41: #{tpu_custom_call.1} parent=1 // pred_fallthru
      _
    // Predicated region
    $region42: #{tpu_custom_call.1} parent=1 // pred_check
      _
    $region43: #{tpu_custom_call.1} parent=1 // pred_check_branch
      %727 = sbr.rel (0) target = $region45
    $region44: #{tpu_custom_call.1} parent=1 // pred_region
      %729 = dma.done [#allocation4], 256
    $region45: #{tpu_custom_call.1} parent=1 // pred_fallthru
      _
    // Predicated region
    $region46: #{tpu_custom_call.1} parent=1 // pred_check
      _
    $region47: #{tpu_custom_call.1} parent=1 // pred_check_branch
      %731 = sbr.rel (0) target = $region49
    $region48: #{tpu_custom_call.1} parent=1 // pred_region
      %733 = dma.done [#allocation10], 1024
    $region49: #{tpu_custom_call.1} parent=1 // pred_fallthru
      _
    %734 = vsyncpa [#allocation3], 1
    %735 = vsyncpa [#allocation6], 1
    %736 = vsyncpa [#allocation4], 1
    %737 = vsyncpa [#allocation10], 1

</llo_original>
